<compile_context>
chip_gen: v7x
topology: tpu7x:2x2x1
jax: 0.10.0
libtpu: 0.0.40
codegen_flags: <defaults>
</compile_context>

<pallas_src>
import functools
import math

import jax
import jax.numpy as jnp
from jax import lax
from jax.experimental import pallas as pl
from jax.experimental.pallas import tpu as pltpu


def _round_up(x, m):
    return (x + m - 1) // m * m


def _mha_kernel(x_ref, w_ref, o_ref, *, n_heads, dh, dh_pad, scale):
    # One batch element per grid step; all heads computed here.
    x = x_ref[0]                      # (T, D), native dtype -> MXU
    w = w_ref[...]                    # (D, 2*H*dh + H*dh_pad), native dtype
    T = x.shape[0]

    # Fused Q/K/V projection: one lane-dense matmul, f32 accumulation.
    qkv = jnp.dot(x, w, preferred_element_type=jnp.float32)      # (T, Wn)

    # Causal (lower-triangular) mask, built once and reused for every head.
    row = lax.broadcasted_iota(jnp.int32, (T, T), 0)
    col = lax.broadcasted_iota(jnp.int32, (T, T), 1)
    causal = col <= row

    q_off = 0
    k_off = n_heads * dh
    v_off = 2 * n_heads * dh

    acc = jnp.zeros((T, dh_pad), jnp.float32)
    for h in range(n_heads):          # static unroll over heads (H is small)
        q = qkv[:, q_off + h * dh: q_off + (h + 1) * dh] * scale   # fold 1/sqrt(dh)
        k = qkv[:, k_off + h * dh: k_off + (h + 1) * dh]
        v = qkv[:, v_off + h * dh_pad: v_off + (h + 1) * dh_pad]   # zero-padded lanes

        # q @ k^T without materializing k.T: contract last dims of both.
        s = lax.dot_general(q, k, (((1,), (1,)), ((), ())),
                            preferred_element_type=jnp.float32)    # (T, T)
        s = jnp.where(causal, s, -1e30)   # finite sentinel (NaN-safe if tiled later)

        m = s.max(axis=-1, keepdims=True)
        p = jnp.exp(s - m)
        denom = p.sum(axis=-1, keepdims=True)
        p = p * pl.reciprocal(denom, approx=False)   # EUP path; exact to keep 1e-5 tol

        acc = acc + jnp.dot(p, v, preferred_element_type=jnp.float32)  # (T, dh_pad)

    # attention_aggregate == 'mean': average over heads.
    o_ref[0] = (acc * (1.0 / n_heads)).astype(o_ref.dtype)


def masked_self_attention(x, wq, wk, wv, n_heads, per_head_dim):
    """x: (B, T, input_dim); wq/wk/wv: PyTorch-style Linear weights (n_heads*dh, input_dim)."""
    B, T, D = x.shape
    dh = per_head_dim
    dh_pad = _round_up(dh, 128)       # lane-dense output store

    # y = x @ W^T ; PyTorch reshape(B, T, H, dh) => head-major, dh-minor along the
    # output dim, so W.T = (D, H*dh) already has the per-head column layout.
    wq_t = wq.T                                         # (D, H*dh)
    wk_t = wk.T                                         # (D, H*dh)
    wv_t = wv.T.reshape(D, n_heads, dh)
    wv_pad = jnp.pad(wv_t, ((0, 0), (0, 0), (0, dh_pad - dh)))
    wv_pad = wv_pad.reshape(D, n_heads * dh_pad)        # (D, H*dh_pad), zero pad lanes

    w_qkv = jnp.concatenate([wq_t, wk_t, wv_pad], axis=1).astype(x.dtype)
    Wn = w_qkv.shape[1]

    kernel = functools.partial(
        _mha_kernel, n_heads=n_heads, dh=dh, dh_pad=dh_pad,
        scale=1.0 / math.sqrt(dh))

    flops = 2 * B * T * D * Wn + 2 * B * n_heads * T * T * (dh + dh_pad)
    bytes_accessed = (x.size * x.dtype.itemsize
                      + w_qkv.size * w_qkv.dtype.itemsize
                      + B * T * dh_pad * x.dtype.itemsize)
    cost = pl.CostEstimate(flops=int(flops),
                           transcendentals=int(B * n_heads * T * T),
                           bytes_accessed=int(bytes_accessed))

    out_pad = pl.pallas_call(
        kernel,
        out_shape=jax.ShapeDtypeStruct((B, T, dh_pad), x.dtype),
        grid_spec=pltpu.PrefetchScalarGridSpec(
            num_scalar_prefetch=0,
            grid=(B,),
            in_specs=[
                pl.BlockSpec((1, T, D), lambda b: (b, 0, 0)),
                pl.BlockSpec((D, Wn), lambda b: (0, 0)),   # weights resident across grid
            ],
            out_specs=pl.BlockSpec((1, T, dh_pad), lambda b: (b, 0, 0)),
        ),
        compiler_params=pltpu.CompilerParams(
            dimension_semantics=("parallel",)),
        cost_estimate=cost,
    )(x, w_qkv)

    return out_pad[:, :, :dh]


def _reference(x, wq, wk, wv, n_heads, dh):
    B, T, D = x.shape
    q = (x @ wq.T).reshape(B, T, n_heads, dh).transpose(0, 2, 1, 3)
    k = (x @ wk.T).reshape(B, T, n_heads, dh).transpose(0, 2, 3, 1)
    v = (x @ wv.T).reshape(B, T, n_heads, dh).transpose(0, 2, 1, 3)
    s = (q @ k) / math.sqrt(dh)
    mask = jnp.where(jnp.tril(jnp.ones((T, T))) == 0, -jnp.inf, 0.0)
    s = s + mask
    p = jax.nn.softmax(s, axis=-1)
    out = p @ v                                   # (B, H, T, dh)
    return out.transpose(0, 2, 1, 3).mean(axis=2)  # mean over heads


if __name__ == "__main__":
    key = jax.random.PRNGKey(0)
    B, T = 2, 8
    input_dim, output_dim, n_heads = 16, 32, 4
    per_head_dim = output_dim  # attention_aggregate == 'mean'

    k1, k2, k3, k4 = jax.random.split(key, 4)
    x = jax.random.normal(k1, (B, T, input_dim), dtype=jnp.float32)
    # nn.Linear(input_dim, n_heads*dh, bias=False): weight shape (n_heads*dh, input_dim)
    bound = 1.0 / math.sqrt(input_dim)
    wq = jax.random.uniform(k2, (n_heads * per_head_dim, input_dim), jnp.float32, -bound, bound)
    wk = jax.random.uniform(k3, (n_heads * per_head_dim, input_dim), jnp.float32, -bound, bound)
    wv = jax.random.uniform(k4, (n_heads * per_head_dim, input_dim), jnp.float32, -bound, bound)

    out = masked_self_attention(x, wq, wk, wv, n_heads, per_head_dim)
    out = jax.block_until_ready(out)

    ref = _reference(x, wq, wk, wv, n_heads, per_head_dim)
    assert out.shape == (B, T, per_head_dim)
    assert jnp.allclose(out, ref, rtol=1e-5, atol=1e-5), "mismatch vs JAX reference"

    print("KERNEL_OK")
</pallas_src>

<mosaic_0001>
module attributes {stable_mosaic.version = 11 : i64} {
  func.func @_mha_kernel(%arg0: i32, %arg1: memref<1x8x16xf32, #tpu.memory_space<vmem>>, %arg2: memref<16x768xf32, #tpu.memory_space<vmem>>, %arg3: memref<1x8x128xf32, #tpu.memory_space<vmem>>) attributes {dimension_semantics = [#tpu.dimension_semantics<parallel>], iteration_bounds = array<i64: 2>, scalar_prefetch = 0 : i64, scratch_operands = 0 : i64, tpu.core_type = #tpu.core_type<tc>, window_params = [{transform_indices = @transform_0, window_bounds = array<i64: 1, 8, 16>}, {pipeline_mode = #tpu.pipeline_mode<synchronous>, transform_indices = @transform_1, window_bounds = array<i64: 16, 768>}, {transform_indices = @transform_2, window_bounds = array<i64: 1, 8, 128>}]} {
    %c0 = arith.constant 0 : index
    %c0_0 = arith.constant 0 : index
    %c0_1 = arith.constant 0 : index
    %0 = vector.load %arg1[%c0, %c0_0, %c0_1] : memref<1x8x16xf32, #tpu.memory_space<vmem>>, vector<1x8x16xf32>
    %1 = vector.shape_cast %0 : vector<1x8x16xf32> to vector<8x16xf32>
    %c0_2 = arith.constant 0 : index
    %c0_3 = arith.constant 0 : index
    %2 = vector.load %arg2[%c0_2, %c0_3] : memref<16x768xf32, #tpu.memory_space<vmem>>, vector<16x768xf32>
    %cst = arith.constant dense<0.000000e+00> : vector<8x768xf32>
    %3 = tpu.matmul %1, %2, %cst {dimension_numbers = #tpu.dot_dimension_numbers<[1], [0], [0], [1], [0, 0, 1, 1], [], []>} : vector<8x16xf32>, vector<16x768xf32>, vector<8x768xf32> -> vector<8x768xf32>
    %4 = tpu.iota {dimensions = array<i32: 0>} : vector<8x8xi32>
    %5 = tpu.iota {dimensions = array<i32: 1>} : vector<8x8xi32>
    %6 = arith.cmpi sle, %5, %4 : vector<8x8xi32>
    %cst_4 = arith.constant 0.000000e+00 : f32
    %7 = vector.broadcast %cst_4 : f32 to vector<8x128xf32>
    %8 = vector.extract_strided_slice %3 {offsets = [0, 0], sizes = [8, 32], strides = [1, 1]} : vector<8x768xf32> to vector<8x32xf32>
    %cst_5 = arith.constant 0.176776692 : f32
    %9 = vector.broadcast %cst_5 : f32 to vector<8x32xf32>
    %10 = arith.mulf %8, %9 : vector<8x32xf32>
    %11 = vector.extract_strided_slice %3 {offsets = [0, 128], sizes = [8, 32], strides = [1, 1]} : vector<8x768xf32> to vector<8x32xf32>
    %12 = vector.extract_strided_slice %3 {offsets = [0, 256], sizes = [8, 128], strides = [1, 1]} : vector<8x768xf32> to vector<8x128xf32>
    %cst_6 = arith.constant dense<0.000000e+00> : vector<8x8xf32>
    %13 = tpu.matmul %10, %11, %cst_6 {dimension_numbers = #tpu.dot_dimension_numbers<[1], [1], [0], [0], [0, 0, 1, 0], [], []>} : vector<8x32xf32>, vector<8x32xf32>, vector<8x8xf32> -> vector<8x8xf32>
    %cst_7 = arith.constant -1.000000e+30 : f32
    %14 = vector.broadcast %cst_7 : f32 to vector<8x8xf32>
    %15 = arith.select %6, %13, %14 : vector<8x8xi1>, vector<8x8xf32>
    %cst_8 = arith.constant dense<0xFF800000> : vector<8xf32>
    %16 = vector.multi_reduction <maximumf>, %15, %cst_8 [1] : vector<8x8xf32> to vector<8xf32>
    %17 = vector.shape_cast %16 : vector<8xf32> to vector<8x1xf32>
    %18 = vector.broadcast %17 : vector<8x1xf32> to vector<8x8xf32>
    %19 = arith.subf %15, %18 : vector<8x8xf32>
    %20 = math.exp %19 : vector<8x8xf32>
    %cst_9 = arith.constant dense<0.000000e+00> : vector<8xf32>
    %21 = vector.multi_reduction <add>, %20, %cst_9 [1] : vector<8x8xf32> to vector<8xf32>
    %22 = vector.shape_cast %21 : vector<8xf32> to vector<8x1xf32>
    %23 = tpu.reciprocal %22 : vector<8x1xf32> -> vector<8x1xf32>
    %24 = vector.broadcast %23 : vector<8x1xf32> to vector<8x8xf32>
    %25 = arith.mulf %20, %24 : vector<8x8xf32>
    %cst_10 = arith.constant dense<0.000000e+00> : vector<8x128xf32>
    %26 = tpu.matmul %25, %12, %cst_10 {dimension_numbers = #tpu.dot_dimension_numbers<[1], [0], [0], [1], [0, 0, 1, 1], [], []>} : vector<8x8xf32>, vector<8x128xf32>, vector<8x128xf32> -> vector<8x128xf32>
    %27 = arith.addf %7, %26 : vector<8x128xf32>
    %28 = vector.extract_strided_slice %3 {offsets = [0, 32], sizes = [8, 32], strides = [1, 1]} : vector<8x768xf32> to vector<8x32xf32>
    %cst_11 = arith.constant 0.176776692 : f32
    %29 = vector.broadcast %cst_11 : f32 to vector<8x32xf32>
    %30 = arith.mulf %28, %29 : vector<8x32xf32>
    %31 = vector.extract_strided_slice %3 {offsets = [0, 160], sizes = [8, 32], strides = [1, 1]} : vector<8x768xf32> to vector<8x32xf32>
    %32 = vector.extract_strided_slice %3 {offsets = [0, 384], sizes = [8, 128], strides = [1, 1]} : vector<8x768xf32> to vector<8x128xf32>
    %cst_12 = arith.constant dense<0.000000e+00> : vector<8x8xf32>
    %33 = tpu.matmul %30, %31, %cst_12 {dimension_numbers = #tpu.dot_dimension_numbers<[1], [1], [0], [0], [0, 0, 1, 0], [], []>} : vector<8x32xf32>, vector<8x32xf32>, vector<8x8xf32> -> vector<8x8xf32>
    %cst_13 = arith.constant -1.000000e+30 : f32
    %34 = vector.broadcast %cst_13 : f32 to vector<8x8xf32>
    %35 = arith.select %6, %33, %34 : vector<8x8xi1>, vector<8x8xf32>
    %cst_14 = arith.constant dense<0xFF800000> : vector<8xf32>
    %36 = vector.multi_reduction <maximumf>, %35, %cst_14 [1] : vector<8x8xf32> to vector<8xf32>
    %37 = vector.shape_cast %36 : vector<8xf32> to vector<8x1xf32>
    %38 = vector.broadcast %37 : vector<8x1xf32> to vector<8x8xf32>
    %39 = arith.subf %35, %38 : vector<8x8xf32>
    %40 = math.exp %39 : vector<8x8xf32>
    %cst_15 = arith.constant dense<0.000000e+00> : vector<8xf32>
    %41 = vector.multi_reduction <add>, %40, %cst_15 [1] : vector<8x8xf32> to vector<8xf32>
    %42 = vector.shape_cast %41 : vector<8xf32> to vector<8x1xf32>
    %43 = tpu.reciprocal %42 : vector<8x1xf32> -> vector<8x1xf32>
    %44 = vector.broadcast %43 : vector<8x1xf32> to vector<8x8xf32>
    %45 = arith.mulf %40, %44 : vector<8x8xf32>
    %cst_16 = arith.constant dense<0.000000e+00> : vector<8x128xf32>
    %46 = tpu.matmul %45, %32, %cst_16 {dimension_numbers = #tpu.dot_dimension_numbers<[1], [0], [0], [1], [0, 0, 1, 1], [], []>} : vector<8x8xf32>, vector<8x128xf32>, vector<8x128xf32> -> vector<8x128xf32>
    %47 = arith.addf %27, %46 : vector<8x128xf32>
    %48 = vector.extract_strided_slice %3 {offsets = [0, 64], sizes = [8, 32], strides = [1, 1]} : vector<8x768xf32> to vector<8x32xf32>
    %cst_17 = arith.constant 0.176776692 : f32
    %49 = vector.broadcast %cst_17 : f32 to vector<8x32xf32>
    %50 = arith.mulf %48, %49 : vector<8x32xf32>
    %51 = vector.extract_strided_slice %3 {offsets = [0, 192], sizes = [8, 32], strides = [1, 1]} : vector<8x768xf32> to vector<8x32xf32>
    %52 = vector.extract_strided_slice %3 {offsets = [0, 512], sizes = [8, 128], strides = [1, 1]} : vector<8x768xf32> to vector<8x128xf32>
    %cst_18 = arith.constant dense<0.000000e+00> : vector<8x8xf32>
    %53 = tpu.matmul %50, %51, %cst_18 {dimension_numbers = #tpu.dot_dimension_numbers<[1], [1], [0], [0], [0, 0, 1, 0], [], []>} : vector<8x32xf32>, vector<8x32xf32>, vector<8x8xf32> -> vector<8x8xf32>
    %cst_19 = arith.constant -1.000000e+30 : f32
    %54 = vector.broadcast %cst_19 : f32 to vector<8x8xf32>
    %55 = arith.select %6, %53, %54 : vector<8x8xi1>, vector<8x8xf32>
    %cst_20 = arith.constant dense<0xFF800000> : vector<8xf32>
    %56 = vector.multi_reduction <maximumf>, %55, %cst_20 [1] : vector<8x8xf32> to vector<8xf32>
    %57 = vector.shape_cast %56 : vector<8xf32> to vector<8x1xf32>
    %58 = vector.broadcast %57 : vector<8x1xf32> to vector<8x8xf32>
    %59 = arith.subf %55, %58 : vector<8x8xf32>
    %60 = math.exp %59 : vector<8x8xf32>
    %cst_21 = arith.constant dense<0.000000e+00> : vector<8xf32>
    %61 = vector.multi_reduction <add>, %60, %cst_21 [1] : vector<8x8xf32> to vector<8xf32>
    %62 = vector.shape_cast %61 : vector<8xf32> to vector<8x1xf32>
    %63 = tpu.reciprocal %62 : vector<8x1xf32> -> vector<8x1xf32>
    %64 = vector.broadcast %63 : vector<8x1xf32> to vector<8x8xf32>
    %65 = arith.mulf %60, %64 : vector<8x8xf32>
    %cst_22 = arith.constant dense<0.000000e+00> : vector<8x128xf32>
    %66 = tpu.matmul %65, %52, %cst_22 {dimension_numbers = #tpu.dot_dimension_numbers<[1], [0], [0], [1], [0, 0, 1, 1], [], []>} : vector<8x8xf32>, vector<8x128xf32>, vector<8x128xf32> -> vector<8x128xf32>
    %67 = arith.addf %47, %66 : vector<8x128xf32>
    %68 = vector.extract_strided_slice %3 {offsets = [0, 96], sizes = [8, 32], strides = [1, 1]} : vector<8x768xf32> to vector<8x32xf32>
    %cst_23 = arith.constant 0.176776692 : f32
    %69 = vector.broadcast %cst_23 : f32 to vector<8x32xf32>
    %70 = arith.mulf %68, %69 : vector<8x32xf32>
    %71 = vector.extract_strided_slice %3 {offsets = [0, 224], sizes = [8, 32], strides = [1, 1]} : vector<8x768xf32> to vector<8x32xf32>
    %72 = vector.extract_strided_slice %3 {offsets = [0, 640], sizes = [8, 128], strides = [1, 1]} : vector<8x768xf32> to vector<8x128xf32>
    %cst_24 = arith.constant dense<0.000000e+00> : vector<8x8xf32>
    %73 = tpu.matmul %70, %71, %cst_24 {dimension_numbers = #tpu.dot_dimension_numbers<[1], [1], [0], [0], [0, 0, 1, 0], [], []>} : vector<8x32xf32>, vector<8x32xf32>, vector<8x8xf32> -> vector<8x8xf32>
    %cst_25 = arith.constant -1.000000e+30 : f32
    %74 = vector.broadcast %cst_25 : f32 to vector<8x8xf32>
    %75 = arith.select %6, %73, %74 : vector<8x8xi1>, vector<8x8xf32>
    %cst_26 = arith.constant dense<0xFF800000> : vector<8xf32>
    %76 = vector.multi_reduction <maximumf>, %75, %cst_26 [1] : vector<8x8xf32> to vector<8xf32>
    %77 = vector.shape_cast %76 : vector<8xf32> to vector<8x1xf32>
    %78 = vector.broadcast %77 : vector<8x1xf32> to vector<8x8xf32>
    %79 = arith.subf %75, %78 : vector<8x8xf32>
    %80 = math.exp %79 : vector<8x8xf32>
    %cst_27 = arith.constant dense<0.000000e+00> : vector<8xf32>
    %81 = vector.multi_reduction <add>, %80, %cst_27 [1] : vector<8x8xf32> to vector<8xf32>
    %82 = vector.shape_cast %81 : vector<8xf32> to vector<8x1xf32>
    %83 = tpu.reciprocal %82 : vector<8x1xf32> -> vector<8x1xf32>
    %84 = vector.broadcast %83 : vector<8x1xf32> to vector<8x8xf32>
    %85 = arith.mulf %80, %84 : vector<8x8xf32>
    %cst_28 = arith.constant dense<0.000000e+00> : vector<8x128xf32>
    %86 = tpu.matmul %85, %72, %cst_28 {dimension_numbers = #tpu.dot_dimension_numbers<[1], [0], [0], [1], [0, 0, 1, 1], [], []>} : vector<8x8xf32>, vector<8x128xf32>, vector<8x128xf32> -> vector<8x128xf32>
    %87 = arith.addf %67, %86 : vector<8x128xf32>
    %cst_29 = arith.constant 2.500000e-01 : f32
    %88 = vector.broadcast %cst_29 : f32 to vector<8x128xf32>
    %89 = arith.mulf %87, %88 : vector<8x128xf32>
    %c0_30 = arith.constant 0 : index
    %c0_31 = arith.constant 0 : index
    %c0_32 = arith.constant 0 : index
    %90 = vector.load %arg3[%c0_30, %c0_31, %c0_32] : memref<1x8x128xf32, #tpu.memory_space<vmem>>, vector<1x8x128xf32>
    %91 = vector.shape_cast %90 : vector<1x8x128xf32> to vector<8x128xf32>
    %92 = vector.shape_cast %89 : vector<8x128xf32> to vector<1x8x128xf32>
    tpu.vector_store %arg3[%c0_30, %c0_31, %c0_32], %92 {strides = array<i32>} : memref<1x8x128xf32, #tpu.memory_space<vmem>>, vector<1x8x128xf32>,
    return
  }
  func.func @transform_0(%arg0: i32) -> (i32, i32, i32) {
    %c0_i32 = arith.constant 0 : i32
    %c0_i32_0 = arith.constant 0 : i32
    %c0_i32_1 = arith.constant 0 : i32
    return %arg0, %c0_i32, %c0_i32_0 : i32, i32, i32
  }
  func.func @transform_1(%arg0: i32) -> (i32, i32) {
    %c0_i32 = arith.constant 0 : i32
    %c0_i32_0 = arith.constant 0 : i32
    %c0_i32_1 = arith.constant 0 : i32
    return %c0_i32, %c0_i32_0 : i32, i32
  }
  func.func @transform_2(%arg0: i32) -> (i32, i32, i32) {
    %c0_i32 = arith.constant 0 : i32
    %c0_i32_0 = arith.constant 0 : i32
    %c0_i32_1 = arith.constant 0 : i32
    return %arg0, %c0_i32, %c0_i32_0 : i32, i32, i32
  }
}

</mosaic_0001>

<llo_original>
// kernel: tpu_custom_call.1
$region0: #{tpu_custom_call.1}
  #allocation0 [shape = 'u32[]', space=smem, size = 0x4, offset = 0x4, fixed_abs, tag = 'smem constant byte address 0x4 - core index']
  #allocation1 [shape = 'u32[144,128]{1,0:T(1,128)}', space=vmem, size = 0x12000, scoped, tag = 'internal scratch']
  %s0 = inlined_call_operand.hbm [shape: f32[2,8,16], index: 0, kind: input, shape index: {}]
  %s1 = inlined_call_operand.hbm [shape: f32[16,768], index: 1, kind: input, shape index: {}]
  %s2 = inlined_call_operand.hbm [shape: f32[2,8,128], index: 2, kind: output, shape index: {}]
  %s3 = sld [smem:[#allocation0]]
  $region49: #{tpu_custom_call.1} parent=0
    _
  %s5 = ssub.s32 1, %s3
  %s6 = scalar_select 0, %s5, %s3
  $region1: #{tpu_custom_call.1} parent=0
    #allocation2 [shape = 'u8[8192]{0}', space=vmem, size = 0x2000, scoped, tag = 'input window, operand 0']
    #allocation3 [shape = 's32[2]{0}', space=sflag, size = 0x8, scoped, tag = 'scoped memory for tpu_custom_call.1']
    #allocation4 [shape = 's32[2]{0}', space=sflag, size = 0x8, scoped, tag = 'scoped memory for tpu_custom_call.1']
    #allocation5 [shape = 'u8[49152]{0}', space=vmem, size = 0xc000, scoped, tag = 'input window, operand 1, single buffered']
    #allocation6 [shape = 's32[1]{0}', space=sflag, size = 0x4, scoped, tag = 'scoped memory for tpu_custom_call.1']
    #allocation7 [shape = 'u8[8192]{0}', space=vmem, size = 0x2000, scoped, tag = 'output window, operand 0']
    %7 = vsyncpa [#allocation3], 0
    %s8 = scalar_lea.sflag [#allocation3], 1
    %9 = vsyncpa %s8, 0
    %10 = vsyncpa [#allocation6], 0
    %11 = vsyncpa [#allocation4], 0
    %s12 = scalar_lea.sflag [#allocation4], 1
    %13 = vsyncpa %s12, 0
    loop: start=0, step=1, limit=4
    $region2: #{tpu_custom_call.1} parent=1 // loop_pre_header
      _
    $region3: #{tpu_custom_call.1} parent=1 // loop_header
      %s15 = sphi 0, %s19
      %p16 = scmp.ge.s32.totalorder %s15, 4
      %s25 = sphi 0, %s27
      %s28 = sphi 0, %s25
      %s29 = sphi 0, %s28
      %s45 = sphi 0, %s29
      %s49 = sphi 0, %s49
      %s51 = sphi 0, %s49
      %s52 = sphi 0, %s51
      %s66 = sphi 0, %s52
      %s72 = sphi 0, %s74
      %s75 = sphi 0, %s72
      %s76 = sphi 0, %s75
      %s92 = sphi 0, %s76
    $region4: #{tpu_custom_call.1} parent=1 // loop_header_branch
      %18 = sbr.rel (%p16) target = $region8
    $region5: #{tpu_custom_call.1} parent=1 // loop_body
      %s20 = ssub.s32 %s15, 1
      %s21 = ssub.s32 %s15, 2
      %s22 = sadd.s32 %s15, 1
      %s23 = ssub.s32 %s15, %s22
      %p24 = scmp.eq.s32.totalorder %s23, 0
      %s26 = sadd.s32 %s25, 1
      %s27 = scalar_select %p24, %s25, %s26
      %p30 = pneg %p24
      %p31 = scmp.eq.s32.totalorder %s15, 1
      %p32 = por %p30, %p31
      %p33 = scmp.ne.s32.totalorder %s25, %s28
      %p34 = scmp.eq.s32.totalorder %s15, 0
      %p35 = por %p33, %p34
      %p36 = scmp.ne.s32.totalorder %s25, %s28
      %p37 = scmp.eq.s32.totalorder %s20, 1
      %p38 = por %p36, %p37
      %p39 = scmp.ne.s32.totalorder %s28, %s29
      %p40 = scmp.eq.s32.totalorder %s20, 0
      %p41 = por %p39, %p40
      %p42 = scmp.ne.s32.totalorder %s28, %s29
      %p43 = scmp.eq.s32.totalorder %s21, 1
      %p44 = por %p42, %p43
      %p46 = scmp.ne.s32.totalorder %s29, %s45
      %p47 = scmp.eq.s32.totalorder %s21, 0
      %p48 = por %p46, %p47
      %s50 = sadd.s32 %s49, 1
      %p53 = scmp.eq.s32.totalorder %s15, 1
      %p54 = scmp.ne.s32.totalorder %s49, %s51
      %p55 = scmp.eq.s32.totalorder %s15, 0
      %p56 = por %p54, %p55
      %p57 = scmp.ne.s32.totalorder %s49, %s51
      %p58 = scmp.eq.s32.totalorder %s20, 1
      %p59 = por %p57, %p58
      %p60 = scmp.ne.s32.totalorder %s51, %s52
      %p61 = scmp.eq.s32.totalorder %s20, 0
      %p62 = por %p60, %p61
      %p63 = scmp.ne.s32.totalorder %s51, %s52
      %p64 = scmp.eq.s32.totalorder %s21, 1
      %p65 = por %p63, %p64
      %p67 = scmp.ne.s32.totalorder %s52, %s66
      %p68 = scmp.eq.s32.totalorder %s21, 0
      %p69 = por %p67, %p68
      %s70 = ssub.s32 %s15, %s22
      %p71 = scmp.eq.s32.totalorder %s70, 0
      %s73 = sadd.s32 %s72, 1
      %s74 = scalar_select %p71, %s72, %s73
      %p77 = pneg %p71
      %p78 = scmp.eq.s32.totalorder %s15, 1
      %p79 = por %p77, %p78
      %p80 = scmp.ne.s32.totalorder %s72, %s75
      %p81 = scmp.eq.s32.totalorder %s15, 0
      %p82 = por %p80, %p81
      %p83 = scmp.ne.s32.totalorder %s72, %s75
      %p84 = scmp.eq.s32.totalorder %s20, 1
      %p85 = por %p83, %p84
      %p86 = scmp.ne.s32.totalorder %s75, %s76
      %p87 = scmp.eq.s32.totalorder %s20, 0
      %p88 = por %p86, %p87
      %p89 = scmp.ne.s32.totalorder %s75, %s76
      %p90 = scmp.eq.s32.totalorder %s21, 1
      %p91 = por %p89, %p90
      %p93 = scmp.ne.s32.totalorder %s76, %s92
      %p94 = scmp.eq.s32.totalorder %s21, 0
      %p95 = por %p93, %p94
      %p96 = scmp.le.s32.totalorder 1, %s15
      %p97 = scmp.lt.s32.totalorder %s15, 3
      %p98 = pnand %p96, %p97
      %p99 = pneg %p98
      // Predicated region
      $region9: #{tpu_custom_call.1} parent=5 // pred_check
        _
      $region10: #{tpu_custom_call.1} parent=5 // pred_check_branch
        %101 = sbr.rel (%p98) target = $region12
      $region11: #{tpu_custom_call.1} parent=5 // pred_region
        %s102 = ssub.s32 %s15, 1
        // Predicated region
        $region13: #{tpu_custom_call.1} parent=11 // pred_check
          %p103 = pneg %p62
        $region14: #{tpu_custom_call.1} parent=11 // pred_check_branch
          %105 = sbr.rel (%p103) target = $region16
        $region15: #{tpu_custom_call.1} parent=11 // pred_region
          %s107 = ssub.s32 1536, 1536
          %108 = vsyncadd [#allocation6], %s107
          %s109 = sshll.u32 [#allocation5], 4
          %s110 = int_to_ptr.vmem [resolvable:$true] %s109
          %115 = dma.hbm_to_vmem [thread:$0]  %s1, 1536, %s110, [#allocation6], 768, 768, 48
        $region16: #{tpu_custom_call.1} parent=11 // pred_fallthru
          _
      $region12: #{tpu_custom_call.1} parent=5 // pred_fallthru
        _
      %p116 = scmp.lt.s32.totalorder %s15, 2
      // Predicated region
      $region17: #{tpu_custom_call.1} parent=5 // pred_check
        %p117 = pneg %p116
      $region18: #{tpu_custom_call.1} parent=5 // pred_check_branch
        %119 = sbr.rel (%p117) target = $region20
      $region19: #{tpu_custom_call.1} parent=5 // pred_region
        // Predicated region
        $region21: #{tpu_custom_call.1} parent=19 // pred_check
          %p120 = pneg %p35
        $region22: #{tpu_custom_call.1} parent=19 // pred_check_branch
          %122 = sbr.rel (%p120) target = $region24
        $region23: #{tpu_custom_call.1} parent=19 // pred_region
          %s123 = sand.u32 %s25, 1
          %s124 = scalar_lea.sflag [#allocation3], %s123
          %s125 = sand.u32 %s25, 1
          %s126 = smul.addr %s125, 8
          %s127 = scalar_lea.vmem [#allocation2], %s126
          %s129 = ssub.s32 128, 128
          %130 = vsyncadd %s124, %s129
          %s131 = smul.addr %s15, 128
          %s132 = scalar_lea.hbm %s0, %s131
          %s134 = sshll.u32 %s127, 4
          %s135 = int_to_ptr.vmem [resolvable:$true] %s134
          %137 = dma.hbm_to_vmem [thread:$0]  %s132, 128, %s135, %s124
        $region24: #{tpu_custom_call.1} parent=19 // pred_fallthru
          _
      $region20: #{tpu_custom_call.1} parent=5 // pred_fallthru
        _
      %p138 = scmp.le.s32.totalorder 1, %s15
      %p139 = scmp.lt.s32.totalorder %s15, 3
      %p140 = pnand %p138, %p139
      %p141 = pneg %p140
      // Predicated region
      $region25: #{tpu_custom_call.1} parent=5 // pred_check
        _
      $region26: #{tpu_custom_call.1} parent=5 // pred_check_branch
        %143 = sbr.rel (%p140) target = $region28
      $region27: #{tpu_custom_call.1} parent=5 // pred_region
        %s144 = ssub.s32 %s15, 1
        %s145 = sand.u32 %s28, 1
        %s146 = scalar_lea.sflag [#allocation3], %s145
        %s147 = sand.u32 %s28, 1
        %s148 = smul.addr %s147, 8
        %s149 = scalar_lea.vmem [#allocation2], %s148
        // Predicated region
        $region29: #{tpu_custom_call.1} parent=27 // pred_check
          %p150 = pneg %p41
        $region30: #{tpu_custom_call.1} parent=27 // pred_check_branch
          %152 = sbr.rel (%p150) target = $region32
        $region31: #{tpu_custom_call.1} parent=27 // pred_region
          %153 = dma.done %s146, 128
        $region32: #{tpu_custom_call.1} parent=27 // pred_fallthru
          _
        // Predicated region
        $region33: #{tpu_custom_call.1} parent=27 // pred_check
          %p154 = pneg %p62
        $region34: #{tpu_custom_call.1} parent=27 // pred_check_branch
          %156 = sbr.rel (%p154) target = $region36
        $region35: #{tpu_custom_call.1} parent=27 // pred_region
          %157 = dma.done [#allocation6], 1536
        $region36: #{tpu_custom_call.1} parent=27 // pred_fallthru
          _
        %s158 = sand.u32 %s28, 1
        %s159 = scalar_lea.sflag [#allocation3], %s158
        %s160 = sand.u32 %s28, 1
        %s161 = smul.addr %s160, 8
        %s162 = scalar_lea.vmem [#allocation2], %s161
        %p163 = pneg %p41
        %p164 = pneg %p38
        %p165 = pneg %p62
        %p166 = pneg %p59
        %p167 = pneg %p88
        %p168 = pneg %p85
        %s169 = sand.u32 %s75, 1
        %s170 = scalar_lea.sflag [#allocation4], %s169
        %s171 = sand.u32 %s75, 1
        %s172 = smul.addr %s171, 8
        %s173 = scalar_lea.vmem [#allocation7], %s172
        %v174 = vld [vmem:[%s149] sm:$0xff]
        %v175 = vld [vmem:[#allocation5] sm:$0xff]
        %v176 = vld [vmem:[#allocation5 + $0x8] sm:$0xff]
        %v177 = vld [vmem:[#allocation5 + $0x10] sm:$0xff]
        %v178 = vld [vmem:[#allocation5 + $0x18] sm:$0xff]
        %v179 = vld [vmem:[#allocation5 + $0x20] sm:$0xff]
        %v180 = vld [vmem:[#allocation5 + $0x28] sm:$0xff]
        %v181 = vld [vmem:[#allocation5 + $0x30] sm:$0xff]
        %v182 = vld [vmem:[#allocation5 + $0x38] sm:$0xff]
        %v183 = vld [vmem:[#allocation5 + $0x40] sm:$0xff]
        %v184 = vld [vmem:[#allocation5 + $0x48] sm:$0xff]
        %v185 = vld [vmem:[#allocation5 + $0x50] sm:$0xff]
        %v186 = vld [vmem:[#allocation5 + $0x58] sm:$0xff]
        %vm187 = vcmask 130048
        %v189 = vsel %vm187, %v174, 0
        %191 = vmatprep.subr.mxu0 %v176
        %192 = vmatpush1.msra.mxu0 %v175
        %193 = vmatprep.subr.mxu0 %v182
        %194 = vmatpush1.msra.mxu0 %v181
        %195 = vmatprep.subr.mxu0 0.0
        %196 = vmatpush1.msra.mxu0 0.0
        %197 = vmatprep.subr.mxu0 0.0
        %198 = vmatpush1.msra.mxu0 0.0
        %199 = vmatprep.subr.mxu0 0.0
        %200 = vmatpush1.msra.mxu0 0.0
        %201 = vmatprep.subr.mxu0 0.0
        %202 = vmatpush1.msra.mxu0 0.0
        %203 = vmatprep.subr.mxu0 0.0
        %204 = vmatpush1.msra.mxu0 0.0
        %205 = vmatprep.subr.mxu0 0.0
        %206 = vmatpush1.msra.mxu0 0.0
        %207 = vmatprep.subr.mxu0 0.0
        %208 = vmatpush1.msra.mxu0 0.0
        %209 = vmatprep.subr.mxu0 0.0
        %210 = vmatpush1.msra.mxu0 0.0
        %211 = vmatprep.subr.mxu0 0.0
        %212 = vmatpush1.msra.mxu0 0.0
        %213 = vmatprep.subr.mxu0 0.0
        %214 = vmatpush1.msra.mxu0 0.0
        %215 = vmatprep.subr.mxu0 0.0
        %216 = vmatpush1.msra.mxu0 0.0
        %217 = vmatprep.subr.mxu0 0.0
        %218 = vmatpush1.msra.mxu0 0.0
        %219 = vmatprep.subr.mxu0 0.0
        %220 = vmatpush1.msra.mxu0 0.0
        %221 = vmatprep.subr.mxu0 0.0
        %222 = vmatpush1.msra.mxu0 0.0
        %223 = vmatprep.subr.mxu0 0.0
        %224 = vmatpush1.msra.mxu0 0.0
        %225 = vmatprep.subr.mxu0 0.0
        %226 = vmatpush1.msra.mxu0 0.0
        %227 = vmatprep.subr.mxu0 0.0
        %228 = vmatpush1.msra.mxu0 0.0
        %229 = vmatprep.subr.mxu0 0.0
        %230 = vmatpush1.msra.mxu0 0.0
        %231 = vmatprep.subr.mxu0 0.0
        %232 = vmatpush1.msra.mxu0 0.0
        %233 = vmatprep.subr.mxu0 0.0
        %234 = vmatpush1.msra.mxu0 0.0
        %235 = vmatprep.subr.mxu0 0.0
        %236 = vmatpush1.msra.mxu0 0.0
        %237 = vmatprep.subr.mxu0 0.0
        %238 = vmatpush1.msra.mxu0 0.0
        %239 = vmatprep.subr.mxu0 0.0
        %240 = vmatpush1.msra.mxu0 0.0
        %241 = vmatprep.subr.mxu0 0.0
        %242 = vmatpush1.msra.mxu0 0.0
        %243 = vmatprep.subr.mxu0 0.0
        %244 = vmatpush1.msra.mxu0 0.0
        %245 = vmatprep.subr.mxu0 0.0
        %246 = vmatpush1.msra.mxu0 0.0
        %247 = vmatprep.subr.mxu0 0.0
        %248 = vmatpush1.msra.mxu0 0.0
        %249 = vmatprep.subr.mxu0 0.0
        %250 = vmatpush1.msra.mxu0 0.0
        %251 = vmatprep.subr.mxu0 0.0
        %252 = vmatpush1.msra.mxu0 0.0
        %253 = vmatprep.subr.mxu0 0.0
        %254 = vmatpush1.msra.mxu0 0.0
        %255 = vmatprep.mubr.f32.mxu0 0.0
        %256 = vmatmul.mubr.f32.gmra.mrb[0].mxu0 %v189
        %v257 = vpop.f32.mrb[0].mxu0
        %v258 = vadd.f32 0.0, %v257
        %v259 = vpop.f32.mrb[0].mxu0
        %v260 = vadd.f32 0.0, %v259
        %261 = vdwg.mxu0
        %262 = vmatprep.subr.mxu0 %v178
        %263 = vmatpush1.msra.mxu0 %v177
        %264 = vmatprep.subr.mxu0 %v184
        %265 = vmatpush1.msra.mxu0 %v183
        %266 = vmatprep.subr.mxu0 0.0
        %267 = vmatpush1.msra.mxu0 0.0
        %268 = vmatprep.subr.mxu0 0.0
        %269 = vmatpush1.msra.mxu0 0.0
        %270 = vmatprep.subr.mxu0 0.0
        %271 = vmatpush1.msra.mxu0 0.0
        %272 = vmatprep.subr.mxu0 0.0
        %273 = vmatpush1.msra.mxu0 0.0
        %274 = vmatprep.subr.mxu0 0.0
        %275 = vmatpush1.msra.mxu0 0.0
        %276 = vmatprep.subr.mxu0 0.0
        %277 = vmatpush1.msra.mxu0 0.0
        %278 = vmatprep.subr.mxu0 0.0
        %279 = vmatpush1.msra.mxu0 0.0
        %280 = vmatprep.subr.mxu0 0.0
        %281 = vmatpush1.msra.mxu0 0.0
        %282 = vmatprep.subr.mxu0 0.0
        %283 = vmatpush1.msra.mxu0 0.0
        %284 = vmatprep.subr.mxu0 0.0
        %285 = vmatpush1.msra.mxu0 0.0
        %286 = vmatprep.subr.mxu0 0.0
        %287 = vmatpush1.msra.mxu0 0.0
        %288 = vmatprep.subr.mxu0 0.0
        %289 = vmatpush1.msra.mxu0 0.0
        %290 = vmatprep.subr.mxu0 0.0
        %291 = vmatpush1.msra.mxu0 0.0
        %292 = vmatprep.subr.mxu0 0.0
        %293 = vmatpush1.msra.mxu0 0.0
        %294 = vmatprep.subr.mxu0 0.0
        %295 = vmatpush1.msra.mxu0 0.0
        %296 = vmatprep.subr.mxu0 0.0
        %297 = vmatpush1.msra.mxu0 0.0
        %298 = vmatprep.subr.mxu0 0.0
        %299 = vmatpush1.msra.mxu0 0.0
        %300 = vmatprep.subr.mxu0 0.0
        %301 = vmatpush1.msra.mxu0 0.0
        %302 = vmatprep.subr.mxu0 0.0
        %303 = vmatpush1.msra.mxu0 0.0
        %304 = vmatprep.subr.mxu0 0.0
        %305 = vmatpush1.msra.mxu0 0.0
        %306 = vmatprep.subr.mxu0 0.0
        %307 = vmatpush1.msra.mxu0 0.0
        %308 = vmatprep.subr.mxu0 0.0
        %309 = vmatpush1.msra.mxu0 0.0
        %310 = vmatprep.subr.mxu0 0.0
        %311 = vmatpush1.msra.mxu0 0.0
        %312 = vmatprep.subr.mxu0 0.0
        %313 = vmatpush1.msra.mxu0 0.0
        %314 = vmatprep.subr.mxu0 0.0
        %315 = vmatpush1.msra.mxu0 0.0
        %316 = vmatprep.subr.mxu0 0.0
        %317 = vmatpush1.msra.mxu0 0.0
        %318 = vmatprep.subr.mxu0 0.0
        %319 = vmatpush1.msra.mxu0 0.0
        %320 = vmatprep.subr.mxu0 0.0
        %321 = vmatpush1.msra.mxu0 0.0
        %322 = vmatprep.subr.mxu0 0.0
        %323 = vmatpush1.msra.mxu0 0.0
        %324 = vmatprep.subr.mxu0 0.0
        %325 = vmatpush1.msra.mxu0 0.0
        %326 = vmatprep.mubr.f32.mxu0 0.0
        %327 = vmatmul.mubr.f32.gmra.mrb[0].mxu0 %v189
        %v328 = vpop.f32.mrb[0].mxu0
        %v329 = vadd.f32 0.0, %v328
        %v330 = vpop.f32.mrb[0].mxu0
        %v331 = vadd.f32 0.0, %v330
        %332 = vdwg.mxu0
        %333 = vmatprep.subr.mxu0 %v180
        %334 = vmatpush1.msra.mxu0 %v179
        %335 = vmatprep.subr.mxu0 %v186
        %336 = vmatpush1.msra.mxu0 %v185
        %337 = vmatprep.subr.mxu0 0.0
        %338 = vmatpush1.msra.mxu0 0.0
        %339 = vmatprep.subr.mxu0 0.0
        %340 = vmatpush1.msra.mxu0 0.0
        %341 = vmatprep.subr.mxu0 0.0
        %342 = vmatpush1.msra.mxu0 0.0
        %343 = vmatprep.subr.mxu0 0.0
        %344 = vmatpush1.msra.mxu0 0.0
        %345 = vmatprep.subr.mxu0 0.0
        %346 = vmatpush1.msra.mxu0 0.0
        %347 = vmatprep.subr.mxu0 0.0
        %348 = vmatpush1.msra.mxu0 0.0
        %349 = vmatprep.subr.mxu0 0.0
        %350 = vmatpush1.msra.mxu0 0.0
        %351 = vmatprep.subr.mxu0 0.0
        %352 = vmatpush1.msra.mxu0 0.0
        %353 = vmatprep.subr.mxu0 0.0
        %354 = vmatpush1.msra.mxu0 0.0
        %355 = vmatprep.subr.mxu0 0.0
        %356 = vmatpush1.msra.mxu0 0.0
        %357 = vmatprep.subr.mxu0 0.0
        %358 = vmatpush1.msra.mxu0 0.0
        %359 = vmatprep.subr.mxu0 0.0
        %360 = vmatpush1.msra.mxu0 0.0
        %361 = vmatprep.subr.mxu0 0.0
        %362 = vmatpush1.msra.mxu0 0.0
        %363 = vmatprep.subr.mxu0 0.0
        %364 = vmatpush1.msra.mxu0 0.0
        %365 = vmatprep.subr.mxu0 0.0
        %366 = vmatpush1.msra.mxu0 0.0
        %367 = vmatprep.subr.mxu0 0.0
        %368 = vmatpush1.msra.mxu0 0.0
        %369 = vmatprep.subr.mxu0 0.0
        %370 = vmatpush1.msra.mxu0 0.0
        %371 = vmatprep.subr.mxu0 0.0
        %372 = vmatpush1.msra.mxu0 0.0
        %373 = vmatprep.subr.mxu0 0.0
        %374 = vmatpush1.msra.mxu0 0.0
        %375 = vmatprep.subr.mxu0 0.0
        %376 = vmatpush1.msra.mxu0 0.0
        %377 = vmatprep.subr.mxu0 0.0
        %378 = vmatpush1.msra.mxu0 0.0
        %379 = vmatprep.subr.mxu0 0.0
        %380 = vmatpush1.msra.mxu0 0.0
        %381 = vmatprep.subr.mxu0 0.0
        %382 = vmatpush1.msra.mxu0 0.0
        %383 = vmatprep.subr.mxu0 0.0
        %384 = vmatpush1.msra.mxu0 0.0
        %385 = vmatprep.subr.mxu0 0.0
        %386 = vmatpush1.msra.mxu0 0.0
        %387 = vmatprep.subr.mxu0 0.0
        %388 = vmatpush1.msra.mxu0 0.0
        %389 = vmatprep.subr.mxu0 0.0
        %390 = vmatpush1.msra.mxu0 0.0
        %391 = vmatprep.subr.mxu0 0.0
        %392 = vmatpush1.msra.mxu0 0.0
        %393 = vmatprep.subr.mxu0 0.0
        %394 = vmatpush1.msra.mxu0 0.0
        %395 = vmatprep.subr.mxu0 0.0
        %396 = vmatpush1.msra.mxu0 0.0
        %397 = vmatprep.mubr.f32.mxu0 0.0
        %398 = vmatmul.mubr.f32.gmra.mrb[0].mxu0 %v189
        %v399 = vpop.f32.mrb[0].mxu0
        %v400 = vadd.f32 0.0, %v399
        %v401 = vpop.f32.mrb[0].mxu0
        %v402 = vadd.f32 0.0, %v401
        %403 = vdwg.mxu0
        %v404 = vlaneseq
        %v405 = vshrl.u32 %v404, 7
        %v406 = vlaneseq
        %v407 = vand.u32 %v406, 127
        %vm408 = vcmp.le.s32.totalorder %v407, %v405
        %v409 = vmul.f32 %v258, 0.17677669
        %vm410 = vcmask 261120
        %v412 = vsel %vm410, %v409, 0
        %v415 = vsel %vm410, %v260, 0
        %417 = vmatprep.subr.mxu0 0.0
        %418 = vmatpush1.xpose.msra.mxu0 %v415
        %419 = vmatprep.subr.mxu0 0.0
        %420 = vmatpush1.xpose.msra.mxu0 0.0
        %421 = vmatprep.subr.mxu0 0.0
        %422 = vmatpush1.xpose.msra.mxu0 0.0
        %423 = vmatprep.subr.mxu0 0.0
        %424 = vmatpush1.xpose.msra.mxu0 0.0
        %425 = vmatprep.subr.mxu0 0.0
        %426 = vmatpush1.xpose.msra.mxu0 0.0
        %427 = vmatprep.subr.mxu0 0.0
        %428 = vmatpush1.xpose.msra.mxu0 0.0
        %429 = vmatprep.subr.mxu0 0.0
        %430 = vmatpush1.xpose.msra.mxu0 0.0
        %431 = vmatprep.subr.mxu0 0.0
        %432 = vmatpush1.xpose.msra.mxu0 0.0
        %433 = vmatprep.subr.mxu0 0.0
        %434 = vmatpush1.xpose.msra.mxu0 0.0
        %435 = vmatprep.subr.mxu0 0.0
        %436 = vmatpush1.xpose.msra.mxu0 0.0
        %437 = vmatprep.subr.mxu0 0.0
        %438 = vmatpush1.xpose.msra.mxu0 0.0
        %439 = vmatprep.subr.mxu0 0.0
        %440 = vmatpush1.xpose.msra.mxu0 0.0
        %441 = vmatprep.subr.mxu0 0.0
        %442 = vmatpush1.xpose.msra.mxu0 0.0
        %443 = vmatprep.subr.mxu0 0.0
        %444 = vmatpush1.xpose.msra.mxu0 0.0
        %445 = vmatprep.subr.mxu0 0.0
        %446 = vmatpush1.xpose.msra.mxu0 0.0
        %447 = vmatprep.subr.mxu0 0.0
        %448 = vmatpush1.xpose.msra.mxu0 0.0
        %449 = vmatprep.subr.mxu0 0.0
        %450 = vmatpush1.xpose.msra.mxu0 0.0
        %451 = vmatprep.subr.mxu0 0.0
        %452 = vmatpush1.xpose.msra.mxu0 0.0
        %453 = vmatprep.subr.mxu0 0.0
        %454 = vmatpush1.xpose.msra.mxu0 0.0
        %455 = vmatprep.subr.mxu0 0.0
        %456 = vmatpush1.xpose.msra.mxu0 0.0
        %457 = vmatprep.subr.mxu0 0.0
        %458 = vmatpush1.xpose.msra.mxu0 0.0
        %459 = vmatprep.subr.mxu0 0.0
        %460 = vmatpush1.xpose.msra.mxu0 0.0
        %461 = vmatprep.subr.mxu0 0.0
        %462 = vmatpush1.xpose.msra.mxu0 0.0
        %463 = vmatprep.subr.mxu0 0.0
        %464 = vmatpush1.xpose.msra.mxu0 0.0
        %465 = vmatprep.subr.mxu0 0.0
        %466 = vmatpush1.xpose.msra.mxu0 0.0
        %467 = vmatprep.subr.mxu0 0.0
        %468 = vmatpush1.xpose.msra.mxu0 0.0
        %469 = vmatprep.subr.mxu0 0.0
        %470 = vmatpush1.xpose.msra.mxu0 0.0
        %471 = vmatprep.subr.mxu0 0.0
        %472 = vmatpush1.xpose.msra.mxu0 0.0
        %473 = vmatprep.subr.mxu0 0.0
        %474 = vmatpush1.xpose.msra.mxu0 0.0
        %475 = vmatprep.subr.mxu0 0.0
        %476 = vmatpush1.xpose.msra.mxu0 0.0
        %477 = vmatprep.subr.mxu0 0.0
        %478 = vmatpush1.xpose.msra.mxu0 0.0
        %479 = vmatprep.subr.mxu0 0.0
        %480 = vmatpush1.xpose.msra.mxu0 0.0
        %481 = vmatprep.mubr.f32.mxu0 0.0
        %482 = vmatmul.mubr.f32.gmra.mrb[0].mxu0 %v412
        %v483 = vpop.f32.mrb[0].mxu0
        %v484 = vadd.f32 0.0, %v483
        %v485 = vpop.f32.mrb[0].mxu0
        %486 = vdwg.mxu0
        %v487 = vsel %vm408, %v484, -1e+30
        %vm488 = vcmask 64512
        %v489 = vsel %vm488, %v487, -inf
        %490 = vmax.xlane.f32.xlu0 %v489
        %v491 = vpop.xlane.xlu0 %490
        %v492 = vsub.f32 %v487, %v491
        %v493 = vmul.f32 %v492, 1.442695
        %v494 = vpow.pop %v493
        %v495 = vsel %vm488, %v494, 0.0
        %496 = vadd.xlane.f32.xlu0 %v495
        %v497 = vpop.xlane.xlu0 %496
        %v498 = vrcp.pop %v497
        %v499 = vmul.f32 %v494, %v498
        %500 = vrot.lane.b32.xlu0 %v409, 96
        %v501 = vpop.permute.xlu0 %500
        %502 = vrot.lane.b32.xlu0 %v260, 96
        %v503 = vpop.permute.xlu0 %502
        %v504 = vsel %vm410, %v501, 0
        %v506 = vsel %vm410, %v503, 0
        %508 = vmatprep.subr.mxu0 0.0
        %509 = vmatpush1.xpose.msra.mxu0 %v506
        %510 = vmatprep.subr.mxu0 0.0
        %511 = vmatpush1.xpose.msra.mxu0 0.0
        %512 = vmatprep.subr.mxu0 0.0
        %513 = vmatpush1.xpose.msra.mxu0 0.0
        %514 = vmatprep.subr.mxu0 0.0
        %515 = vmatpush1.xpose.msra.mxu0 0.0
        %516 = vmatprep.subr.mxu0 0.0
        %517 = vmatpush1.xpose.msra.mxu0 0.0
        %518 = vmatprep.subr.mxu0 0.0
        %519 = vmatpush1.xpose.msra.mxu0 0.0
        %520 = vmatprep.subr.mxu0 0.0
        %521 = vmatpush1.xpose.msra.mxu0 0.0
        %522 = vmatprep.subr.mxu0 0.0
        %523 = vmatpush1.xpose.msra.mxu0 0.0
        %524 = vmatprep.subr.mxu0 0.0
        %525 = vmatpush1.xpose.msra.mxu0 0.0
        %526 = vmatprep.subr.mxu0 0.0
        %527 = vmatpush1.xpose.msra.mxu0 0.0
        %528 = vmatprep.subr.mxu0 0.0
        %529 = vmatpush1.xpose.msra.mxu0 0.0
        %530 = vmatprep.subr.mxu0 0.0
        %531 = vmatpush1.xpose.msra.mxu0 0.0
        %532 = vmatprep.subr.mxu0 0.0
        %533 = vmatpush1.xpose.msra.mxu0 0.0
        %534 = vmatprep.subr.mxu0 0.0
        %535 = vmatpush1.xpose.msra.mxu0 0.0
        %536 = vmatprep.subr.mxu0 0.0
        %537 = vmatpush1.xpose.msra.mxu0 0.0
        %538 = vmatprep.subr.mxu0 0.0
        %539 = vmatpush1.xpose.msra.mxu0 0.0
        %540 = vmatprep.subr.mxu0 0.0
        %541 = vmatpush1.xpose.msra.mxu0 0.0
        %542 = vmatprep.subr.mxu0 0.0
        %543 = vmatpush1.xpose.msra.mxu0 0.0
        %544 = vmatprep.subr.mxu0 0.0
        %545 = vmatpush1.xpose.msra.mxu0 0.0
        %546 = vmatprep.subr.mxu0 0.0
        %547 = vmatpush1.xpose.msra.mxu0 0.0
        %548 = vmatprep.subr.mxu0 0.0
        %549 = vmatpush1.xpose.msra.mxu0 0.0
        %550 = vmatprep.subr.mxu0 0.0
        %551 = vmatpush1.xpose.msra.mxu0 0.0
        %552 = vmatprep.subr.mxu0 0.0
        %553 = vmatpush1.xpose.msra.mxu0 0.0
        %554 = vmatprep.subr.mxu0 0.0
        %555 = vmatpush1.xpose.msra.mxu0 0.0
        %556 = vmatprep.subr.mxu0 0.0
        %557 = vmatpush1.xpose.msra.mxu0 0.0
        %558 = vmatprep.subr.mxu0 0.0
        %559 = vmatpush1.xpose.msra.mxu0 0.0
        %560 = vmatprep.subr.mxu0 0.0
        %561 = vmatpush1.xpose.msra.mxu0 0.0
        %562 = vmatprep.subr.mxu0 0.0
        %563 = vmatpush1.xpose.msra.mxu0 0.0
        %564 = vmatprep.subr.mxu0 0.0
        %565 = vmatpush1.xpose.msra.mxu0 0.0
        %566 = vmatprep.subr.mxu0 0.0
        %567 = vmatpush1.xpose.msra.mxu0 0.0
        %568 = vmatprep.subr.mxu0 0.0
        %569 = vmatpush1.xpose.msra.mxu0 0.0
        %570 = vmatprep.subr.mxu0 0.0
        %571 = vmatpush1.xpose.msra.mxu0 0.0
        %572 = vmatprep.mubr.f32.mxu0 0.0
        %573 = vmatmul.mubr.f32.gmra.mrb[0].mxu0 %v504
        %v574 = vpop.f32.mrb[0].mxu0
        %v575 = vadd.f32 0.0, %v574
        %v576 = vpop.f32.mrb[0].mxu0
        %577 = vdwg.mxu0
        %v578 = vsel %vm408, %v575, -1e+30
        %v579 = vsel %vm488, %v578, -inf
        %580 = vmax.xlane.f32.xlu0 %v579
        %v581 = vpop.xlane.xlu0 %580
        %v582 = vsub.f32 %v578, %v581
        %v583 = vmul.f32 %v582, 1.442695
        %v584 = vpow.pop %v583
        %v585 = vsel %vm488, %v584, 0.0
        %586 = vadd.xlane.f32.xlu0 %v585
        %v587 = vpop.xlane.xlu0 %586
        %v588 = vrcp.pop %v587
        %v589 = vmul.f32 %v584, %v588
        %v591 = vsel %vm488, %v589, 0
        %593 = vmatprep.subr.mxu0 0.0
        %594 = vmatpush1.msra.mxu0 %v331
        %595 = vmatprep.subr.mxu0 0.0
        %596 = vmatpush1.msra.mxu0 0.0
        %597 = vmatprep.subr.mxu0 0.0
        %598 = vmatpush1.msra.mxu0 0.0
        %599 = vmatprep.subr.mxu0 0.0
        %600 = vmatpush1.msra.mxu0 0.0
        %601 = vmatprep.subr.mxu0 0.0
        %602 = vmatpush1.msra.mxu0 0.0
        %603 = vmatprep.subr.mxu0 0.0
        %604 = vmatpush1.msra.mxu0 0.0
        %605 = vmatprep.subr.mxu0 0.0
        %606 = vmatpush1.msra.mxu0 0.0
        %607 = vmatprep.subr.mxu0 0.0
        %608 = vmatpush1.msra.mxu0 0.0
        %609 = vmatprep.subr.mxu0 0.0
        %610 = vmatpush1.msra.mxu0 0.0
        %611 = vmatprep.subr.mxu0 0.0
        %612 = vmatpush1.msra.mxu0 0.0
        %613 = vmatprep.subr.mxu0 0.0
        %614 = vmatpush1.msra.mxu0 0.0
        %615 = vmatprep.subr.mxu0 0.0
        %616 = vmatpush1.msra.mxu0 0.0
        %617 = vmatprep.subr.mxu0 0.0
        %618 = vmatpush1.msra.mxu0 0.0
        %619 = vmatprep.subr.mxu0 0.0
        %620 = vmatpush1.msra.mxu0 0.0
        %621 = vmatprep.subr.mxu0 0.0
        %622 = vmatpush1.msra.mxu0 0.0
        %623 = vmatprep.subr.mxu0 0.0
        %624 = vmatpush1.msra.mxu0 0.0
        %625 = vmatprep.subr.mxu0 0.0
        %626 = vmatpush1.msra.mxu0 0.0
        %627 = vmatprep.subr.mxu0 0.0
        %628 = vmatpush1.msra.mxu0 0.0
        %629 = vmatprep.subr.mxu0 0.0
        %630 = vmatpush1.msra.mxu0 0.0
        %631 = vmatprep.subr.mxu0 0.0
        %632 = vmatpush1.msra.mxu0 0.0
        %633 = vmatprep.subr.mxu0 0.0
        %634 = vmatpush1.msra.mxu0 0.0
        %635 = vmatprep.subr.mxu0 0.0
        %636 = vmatpush1.msra.mxu0 0.0
        %637 = vmatprep.subr.mxu0 0.0
        %638 = vmatpush1.msra.mxu0 0.0
        %639 = vmatprep.subr.mxu0 0.0
        %640 = vmatpush1.msra.mxu0 0.0
        %641 = vmatprep.subr.mxu0 0.0
        %642 = vmatpush1.msra.mxu0 0.0
        %643 = vmatprep.subr.mxu0 0.0
        %644 = vmatpush1.msra.mxu0 0.0
        %645 = vmatprep.subr.mxu0 0.0
        %646 = vmatpush1.msra.mxu0 0.0
        %647 = vmatprep.subr.mxu0 0.0
        %648 = vmatpush1.msra.mxu0 0.0
        %649 = vmatprep.subr.mxu0 0.0
        %650 = vmatpush1.msra.mxu0 0.0
        %651 = vmatprep.subr.mxu0 0.0
        %652 = vmatpush1.msra.mxu0 0.0
        %653 = vmatprep.subr.mxu0 0.0
        %654 = vmatpush1.msra.mxu0 0.0
        %655 = vmatprep.subr.mxu0 0.0
        %656 = vmatpush1.msra.mxu0 0.0
        %657 = vmatprep.mubr.f32.mxu0 0.0
        %658 = vmatmul.mubr.f32.gmra.mrb[0].mxu0 %v591
        %v659 = vpop.f32.mrb[0].mxu0
        %v660 = vadd.f32 0.0, %v659
        %v661 = vpop.f32.mrb[0].mxu0
        %662 = vdwg.mxu0
        %v664 = vsel %vm488, %v499, 0
        %666 = vmatprep.subr.mxu0 0.0
        %667 = vmatpush1.msra.mxu0 %v329
        %668 = vmatprep.subr.mxu0 0.0
        %669 = vmatpush1.msra.mxu0 0.0
        %670 = vmatprep.subr.mxu0 0.0
        %671 = vmatpush1.msra.mxu0 0.0
        %672 = vmatprep.subr.mxu0 0.0
        %673 = vmatpush1.msra.mxu0 0.0
        %674 = vmatprep.subr.mxu0 0.0
        %675 = vmatpush1.msra.mxu0 0.0
        %676 = vmatprep.subr.mxu0 0.0
        %677 = vmatpush1.msra.mxu0 0.0
        %678 = vmatprep.subr.mxu0 0.0
        %679 = vmatpush1.msra.mxu0 0.0
        %680 = vmatprep.subr.mxu0 0.0
        %681 = vmatpush1.msra.mxu0 0.0
        %682 = vmatprep.subr.mxu0 0.0
        %683 = vmatpush1.msra.mxu0 0.0
        %684 = vmatprep.subr.mxu0 0.0
        %685 = vmatpush1.msra.mxu0 0.0
        %686 = vmatprep.subr.mxu0 0.0
        %687 = vmatpush1.msra.mxu0 0.0
        %688 = vmatprep.subr.mxu0 0.0
        %689 = vmatpush1.msra.mxu0 0.0
        %690 = vmatprep.subr.mxu0 0.0
        %691 = vmatpush1.msra.mxu0 0.0
        %692 = vmatprep.subr.mxu0 0.0
        %693 = vmatpush1.msra.mxu0 0.0
        %694 = vmatprep.subr.mxu0 0.0
        %695 = vmatpush1.msra.mxu0 0.0
        %696 = vmatprep.subr.mxu0 0.0
        %697 = vmatpush1.msra.mxu0 0.0
        %698 = vmatprep.subr.mxu0 0.0
        %699 = vmatpush1.msra.mxu0 0.0
        %700 = vmatprep.subr.mxu0 0.0
        %701 = vmatpush1.msra.mxu0 0.0
        %702 = vmatprep.subr.mxu0 0.0
        %703 = vmatpush1.msra.mxu0 0.0
        %704 = vmatprep.subr.mxu0 0.0
        %705 = vmatpush1.msra.mxu0 0.0
        %706 = vmatprep.subr.mxu0 0.0
        %707 = vmatpush1.msra.mxu0 0.0
        %708 = vmatprep.subr.mxu0 0.0
        %709 = vmatpush1.msra.mxu0 0.0
        %710 = vmatprep.subr.mxu0 0.0
        %711 = vmatpush1.msra.mxu0 0.0
        %712 = vmatprep.subr.mxu0 0.0
        %713 = vmatpush1.msra.mxu0 0.0
        %714 = vmatprep.subr.mxu0 0.0
        %715 = vmatpush1.msra.mxu0 0.0
        %716 = vmatprep.subr.mxu0 0.0
        %717 = vmatpush1.msra.mxu0 0.0
        %718 = vmatprep.subr.mxu0 0.0
        %719 = vmatpush1.msra.mxu0 0.0
        %720 = vmatprep.subr.mxu0 0.0
        %721 = vmatpush1.msra.mxu0 0.0
        %722 = vmatprep.subr.mxu0 0.0
        %723 = vmatpush1.msra.mxu0 0.0
        %724 = vmatprep.subr.mxu0 0.0
        %725 = vmatpush1.msra.mxu0 0.0
        %726 = vmatprep.subr.mxu0 0.0
        %727 = vmatpush1.msra.mxu0 0.0
        %728 = vmatprep.subr.mxu0 0.0
        %729 = vmatpush1.msra.mxu0 0.0
        %730 = vmatprep.mubr.f32.mxu0 0.0
        %731 = vmatmul.mubr.f32.gmra.mrb[0].mxu0 %v664
        %v732 = vpop.f32.mrb[0].mxu0
        %v733 = vadd.f32 %v660, %v732
        %v734 = vpop.f32.mrb[0].mxu0
        %735 = vdwg.mxu0
        %736 = vrot.lane.b32.xlu0 %v409, 64
        %v737 = vpop.permute.xlu0 %736
        %738 = vrot.lane.b32.xlu0 %v260, 64
        %v739 = vpop.permute.xlu0 %738
        %v740 = vsel %vm410, %v737, 0
        %v742 = vsel %vm410, %v739, 0
        %744 = vmatprep.subr.mxu0 0.0
        %745 = vmatpush1.xpose.msra.mxu0 %v742
        %746 = vmatprep.subr.mxu0 0.0
        %747 = vmatpush1.xpose.msra.mxu0 0.0
        %748 = vmatprep.subr.mxu0 0.0
        %749 = vmatpush1.xpose.msra.mxu0 0.0
        %750 = vmatprep.subr.mxu0 0.0
        %751 = vmatpush1.xpose.msra.mxu0 0.0
        %752 = vmatprep.subr.mxu0 0.0
        %753 = vmatpush1.xpose.msra.mxu0 0.0
        %754 = vmatprep.subr.mxu0 0.0
        %755 = vmatpush1.xpose.msra.mxu0 0.0
        %756 = vmatprep.subr.mxu0 0.0
        %757 = vmatpush1.xpose.msra.mxu0 0.0
        %758 = vmatprep.subr.mxu0 0.0
        %759 = vmatpush1.xpose.msra.mxu0 0.0
        %760 = vmatprep.subr.mxu0 0.0
        %761 = vmatpush1.xpose.msra.mxu0 0.0
        %762 = vmatprep.subr.mxu0 0.0
        %763 = vmatpush1.xpose.msra.mxu0 0.0
        %764 = vmatprep.subr.mxu0 0.0
        %765 = vmatpush1.xpose.msra.mxu0 0.0
        %766 = vmatprep.subr.mxu0 0.0
        %767 = vmatpush1.xpose.msra.mxu0 0.0
        %768 = vmatprep.subr.mxu0 0.0
        %769 = vmatpush1.xpose.msra.mxu0 0.0
        %770 = vmatprep.subr.mxu0 0.0
        %771 = vmatpush1.xpose.msra.mxu0 0.0
        %772 = vmatprep.subr.mxu0 0.0
        %773 = vmatpush1.xpose.msra.mxu0 0.0
        %774 = vmatprep.subr.mxu0 0.0
        %775 = vmatpush1.xpose.msra.mxu0 0.0
        %776 = vmatprep.subr.mxu0 0.0
        %777 = vmatpush1.xpose.msra.mxu0 0.0
        %778 = vmatprep.subr.mxu0 0.0
        %779 = vmatpush1.xpose.msra.mxu0 0.0
        %780 = vmatprep.subr.mxu0 0.0
        %781 = vmatpush1.xpose.msra.mxu0 0.0
        %782 = vmatprep.subr.mxu0 0.0
        %783 = vmatpush1.xpose.msra.mxu0 0.0
        %784 = vmatprep.subr.mxu0 0.0
        %785 = vmatpush1.xpose.msra.mxu0 0.0
        %786 = vmatprep.subr.mxu0 0.0
        %787 = vmatpush1.xpose.msra.mxu0 0.0
        %788 = vmatprep.subr.mxu0 0.0
        %789 = vmatpush1.xpose.msra.mxu0 0.0
        %790 = vmatprep.subr.mxu0 0.0
        %791 = vmatpush1.xpose.msra.mxu0 0.0
        %792 = vmatprep.subr.mxu0 0.0
        %793 = vmatpush1.xpose.msra.mxu0 0.0
        %794 = vmatprep.subr.mxu0 0.0
        %795 = vmatpush1.xpose.msra.mxu0 0.0
        %796 = vmatprep.subr.mxu0 0.0
        %797 = vmatpush1.xpose.msra.mxu0 0.0
        %798 = vmatprep.subr.mxu0 0.0
        %799 = vmatpush1.xpose.msra.mxu0 0.0
        %800 = vmatprep.subr.mxu0 0.0
        %801 = vmatpush1.xpose.msra.mxu0 0.0
        %802 = vmatprep.subr.mxu0 0.0
        %803 = vmatpush1.xpose.msra.mxu0 0.0
        %804 = vmatprep.subr.mxu0 0.0
        %805 = vmatpush1.xpose.msra.mxu0 0.0
        %806 = vmatprep.subr.mxu0 0.0
        %807 = vmatpush1.xpose.msra.mxu0 0.0
        %808 = vmatprep.mubr.f32.mxu0 0.0
        %809 = vmatmul.mubr.f32.gmra.mrb[0].mxu0 %v740
        %v810 = vpop.f32.mrb[0].mxu0
        %v811 = vadd.f32 0.0, %v810
        %v812 = vpop.f32.mrb[0].mxu0
        %813 = vdwg.mxu0
        %v814 = vsel %vm408, %v811, -1e+30
        %v815 = vsel %vm488, %v814, -inf
        %816 = vmax.xlane.f32.xlu0 %v815
        %v817 = vpop.xlane.xlu0 %816
        %v818 = vsub.f32 %v814, %v817
        %v819 = vmul.f32 %v818, 1.442695
        %v820 = vpow.pop %v819
        %v821 = vsel %vm488, %v820, 0.0
        %822 = vadd.xlane.f32.xlu0 %v821
        %v823 = vpop.xlane.xlu0 %822
        %v824 = vrcp.pop %v823
        %v825 = vmul.f32 %v820, %v824
        %v827 = vsel %vm488, %v825, 0
        %829 = vmatprep.subr.mxu0 0.0
        %830 = vmatpush1.msra.mxu0 %v400
        %831 = vmatprep.subr.mxu0 0.0
        %832 = vmatpush1.msra.mxu0 0.0
        %833 = vmatprep.subr.mxu0 0.0
        %834 = vmatpush1.msra.mxu0 0.0
        %835 = vmatprep.subr.mxu0 0.0
        %836 = vmatpush1.msra.mxu0 0.0
        %837 = vmatprep.subr.mxu0 0.0
        %838 = vmatpush1.msra.mxu0 0.0
        %839 = vmatprep.subr.mxu0 0.0
        %840 = vmatpush1.msra.mxu0 0.0
        %841 = vmatprep.subr.mxu0 0.0
        %842 = vmatpush1.msra.mxu0 0.0
        %843 = vmatprep.subr.mxu0 0.0
        %844 = vmatpush1.msra.mxu0 0.0
        %845 = vmatprep.subr.mxu0 0.0
        %846 = vmatpush1.msra.mxu0 0.0
        %847 = vmatprep.subr.mxu0 0.0
        %848 = vmatpush1.msra.mxu0 0.0
        %849 = vmatprep.subr.mxu0 0.0
        %850 = vmatpush1.msra.mxu0 0.0
        %851 = vmatprep.subr.mxu0 0.0
        %852 = vmatpush1.msra.mxu0 0.0
        %853 = vmatprep.subr.mxu0 0.0
        %854 = vmatpush1.msra.mxu0 0.0
        %855 = vmatprep.subr.mxu0 0.0
        %856 = vmatpush1.msra.mxu0 0.0
        %857 = vmatprep.subr.mxu0 0.0
        %858 = vmatpush1.msra.mxu0 0.0
        %859 = vmatprep.subr.mxu0 0.0
        %860 = vmatpush1.msra.mxu0 0.0
        %861 = vmatprep.subr.mxu0 0.0
        %862 = vmatpush1.msra.mxu0 0.0
        %863 = vmatprep.subr.mxu0 0.0
        %864 = vmatpush1.msra.mxu0 0.0
        %865 = vmatprep.subr.mxu0 0.0
        %866 = vmatpush1.msra.mxu0 0.0
        %867 = vmatprep.subr.mxu0 0.0
        %868 = vmatpush1.msra.mxu0 0.0
        %869 = vmatprep.subr.mxu0 0.0
        %870 = vmatpush1.msra.mxu0 0.0
        %871 = vmatprep.subr.mxu0 0.0
        %872 = vmatpush1.msra.mxu0 0.0
        %873 = vmatprep.subr.mxu0 0.0
        %874 = vmatpush1.msra.mxu0 0.0
        %875 = vmatprep.subr.mxu0 0.0
        %876 = vmatpush1.msra.mxu0 0.0
        %877 = vmatprep.subr.mxu0 0.0
        %878 = vmatpush1.msra.mxu0 0.0
        %879 = vmatprep.subr.mxu0 0.0
        %880 = vmatpush1.msra.mxu0 0.0
        %881 = vmatprep.subr.mxu0 0.0
        %882 = vmatpush1.msra.mxu0 0.0
        %883 = vmatprep.subr.mxu0 0.0
        %884 = vmatpush1.msra.mxu0 0.0
        %885 = vmatprep.subr.mxu0 0.0
        %886 = vmatpush1.msra.mxu0 0.0
        %887 = vmatprep.subr.mxu0 0.0
        %888 = vmatpush1.msra.mxu0 0.0
        %889 = vmatprep.subr.mxu0 0.0
        %890 = vmatpush1.msra.mxu0 0.0
        %891 = vmatprep.subr.mxu0 0.0
        %892 = vmatpush1.msra.mxu0 0.0
        %893 = vmatprep.mubr.f32.mxu0 0.0
        %894 = vmatmul.mubr.f32.gmra.mrb[0].mxu0 %v827
        %v895 = vpop.f32.mrb[0].mxu0
        %v896 = vadd.f32 0.0, %v895
        %v897 = vpop.f32.mrb[0].mxu0
        %898 = vdwg.mxu0
        %v899 = vadd.f32 %v733, %v896
        %900 = vrot.lane.b32.xlu0 %v409, 32
        %v901 = vpop.permute.xlu0 %900
        %902 = vrot.lane.b32.xlu0 %v260, 32
        %v903 = vpop.permute.xlu0 %902
        %v904 = vsel %vm410, %v901, 0
        %v906 = vsel %vm410, %v903, 0
        %908 = vmatprep.subr.mxu0 0.0
        %909 = vmatpush1.xpose.msra.mxu0 %v906
        %910 = vmatprep.subr.mxu0 0.0
        %911 = vmatpush1.xpose.msra.mxu0 0.0
        %912 = vmatprep.subr.mxu0 0.0
        %913 = vmatpush1.xpose.msra.mxu0 0.0
        %914 = vmatprep.subr.mxu0 0.0
        %915 = vmatpush1.xpose.msra.mxu0 0.0
        %916 = vmatprep.subr.mxu0 0.0
        %917 = vmatpush1.xpose.msra.mxu0 0.0
        %918 = vmatprep.subr.mxu0 0.0
        %919 = vmatpush1.xpose.msra.mxu0 0.0
        %920 = vmatprep.subr.mxu0 0.0
        %921 = vmatpush1.xpose.msra.mxu0 0.0
        %922 = vmatprep.subr.mxu0 0.0
        %923 = vmatpush1.xpose.msra.mxu0 0.0
        %924 = vmatprep.subr.mxu0 0.0
        %925 = vmatpush1.xpose.msra.mxu0 0.0
        %926 = vmatprep.subr.mxu0 0.0
        %927 = vmatpush1.xpose.msra.mxu0 0.0
        %928 = vmatprep.subr.mxu0 0.0
        %929 = vmatpush1.xpose.msra.mxu0 0.0
        %930 = vmatprep.subr.mxu0 0.0
        %931 = vmatpush1.xpose.msra.mxu0 0.0
        %932 = vmatprep.subr.mxu0 0.0
        %933 = vmatpush1.xpose.msra.mxu0 0.0
        %934 = vmatprep.subr.mxu0 0.0
        %935 = vmatpush1.xpose.msra.mxu0 0.0
        %936 = vmatprep.subr.mxu0 0.0
        %937 = vmatpush1.xpose.msra.mxu0 0.0
        %938 = vmatprep.subr.mxu0 0.0
        %939 = vmatpush1.xpose.msra.mxu0 0.0
        %940 = vmatprep.subr.mxu0 0.0
        %941 = vmatpush1.xpose.msra.mxu0 0.0
        %942 = vmatprep.subr.mxu0 0.0
        %943 = vmatpush1.xpose.msra.mxu0 0.0
        %944 = vmatprep.subr.mxu0 0.0
        %945 = vmatpush1.xpose.msra.mxu0 0.0
        %946 = vmatprep.subr.mxu0 0.0
        %947 = vmatpush1.xpose.msra.mxu0 0.0
        %948 = vmatprep.subr.mxu0 0.0
        %949 = vmatpush1.xpose.msra.mxu0 0.0
        %950 = vmatprep.subr.mxu0 0.0
        %951 = vmatpush1.xpose.msra.mxu0 0.0
        %952 = vmatprep.subr.mxu0 0.0
        %953 = vmatpush1.xpose.msra.mxu0 0.0
        %954 = vmatprep.subr.mxu0 0.0
        %955 = vmatpush1.xpose.msra.mxu0 0.0
        %956 = vmatprep.subr.mxu0 0.0
        %957 = vmatpush1.xpose.msra.mxu0 0.0
        %958 = vmatprep.subr.mxu0 0.0
        %959 = vmatpush1.xpose.msra.mxu0 0.0
        %960 = vmatprep.subr.mxu0 0.0
        %961 = vmatpush1.xpose.msra.mxu0 0.0
        %962 = vmatprep.subr.mxu0 0.0
        %963 = vmatpush1.xpose.msra.mxu0 0.0
        %964 = vmatprep.subr.mxu0 0.0
        %965 = vmatpush1.xpose.msra.mxu0 0.0
        %966 = vmatprep.subr.mxu0 0.0
        %967 = vmatpush1.xpose.msra.mxu0 0.0
        %968 = vmatprep.subr.mxu0 0.0
        %969 = vmatpush1.xpose.msra.mxu0 0.0
        %970 = vmatprep.subr.mxu0 0.0
        %971 = vmatpush1.xpose.msra.mxu0 0.0
        %972 = vmatprep.mubr.f32.mxu0 0.0
        %973 = vmatmul.mubr.f32.gmra.mrb[0].mxu0 %v904
        %v974 = vpop.f32.mrb[0].mxu0
        %v975 = vadd.f32 0.0, %v974
        %v976 = vpop.f32.mrb[0].mxu0
        %977 = vdwg.mxu0
        %v978 = vsel %vm408, %v975, -1e+30
        %v979 = vsel %vm488, %v978, -inf
        %980 = vmax.xlane.f32.xlu0 %v979
        %v981 = vpop.xlane.xlu0 %980
        %v982 = vsub.f32 %v978, %v981
        %v983 = vmul.f32 %v982, 1.442695
        %v984 = vpow.pop %v983
        %v985 = vsel %vm488, %v984, 0.0
        %986 = vadd.xlane.f32.xlu0 %v985
        %v987 = vpop.xlane.xlu0 %986
        %v988 = vrcp.pop %v987
        %v989 = vmul.f32 %v984, %v988
        %v991 = vsel %vm488, %v989, 0
        %993 = vmatprep.subr.mxu0 0.0
        %994 = vmatpush1.msra.mxu0 %v402
        %995 = vmatprep.subr.mxu0 0.0
        %996 = vmatpush1.msra.mxu0 0.0
        %997 = vmatprep.subr.mxu0 0.0
        %998 = vmatpush1.msra.mxu0 0.0
        %999 = vmatprep.subr.mxu0 0.0
        %1000 = vmatpush1.msra.mxu0 0.0
        %1001 = vmatprep.subr.mxu0 0.0
        %1002 = vmatpush1.msra.mxu0 0.0
        %1003 = vmatprep.subr.mxu0 0.0
        %1004 = vmatpush1.msra.mxu0 0.0
        %1005 = vmatprep.subr.mxu0 0.0
        %1006 = vmatpush1.msra.mxu0 0.0
        %1007 = vmatprep.subr.mxu0 0.0
        %1008 = vmatpush1.msra.mxu0 0.0
        %1009 = vmatprep.subr.mxu0 0.0
        %1010 = vmatpush1.msra.mxu0 0.0
        %1011 = vmatprep.subr.mxu0 0.0
        %1012 = vmatpush1.msra.mxu0 0.0
        %1013 = vmatprep.subr.mxu0 0.0
        %1014 = vmatpush1.msra.mxu0 0.0
        %1015 = vmatprep.subr.mxu0 0.0
        %1016 = vmatpush1.msra.mxu0 0.0
        %1017 = vmatprep.subr.mxu0 0.0
        %1018 = vmatpush1.msra.mxu0 0.0
        %1019 = vmatprep.subr.mxu0 0.0
        %1020 = vmatpush1.msra.mxu0 0.0
        %1021 = vmatprep.subr.mxu0 0.0
        %1022 = vmatpush1.msra.mxu0 0.0
        %1023 = vmatprep.subr.mxu0 0.0
        %1024 = vmatpush1.msra.mxu0 0.0
        %1025 = vmatprep.subr.mxu0 0.0
        %1026 = vmatpush1.msra.mxu0 0.0
        %1027 = vmatprep.subr.mxu0 0.0
        %1028 = vmatpush1.msra.mxu0 0.0
        %1029 = vmatprep.subr.mxu0 0.0
        %1030 = vmatpush1.msra.mxu0 0.0
        %1031 = vmatprep.subr.mxu0 0.0
        %1032 = vmatpush1.msra.mxu0 0.0
        %1033 = vmatprep.subr.mxu0 0.0
        %1034 = vmatpush1.msra.mxu0 0.0
        %1035 = vmatprep.subr.mxu0 0.0
        %1036 = vmatpush1.msra.mxu0 0.0
        %1037 = vmatprep.subr.mxu0 0.0
        %1038 = vmatpush1.msra.mxu0 0.0
        %1039 = vmatprep.subr.mxu0 0.0
        %1040 = vmatpush1.msra.mxu0 0.0
        %1041 = vmatprep.subr.mxu0 0.0
        %1042 = vmatpush1.msra.mxu0 0.0
        %1043 = vmatprep.subr.mxu0 0.0
        %1044 = vmatpush1.msra.mxu0 0.0
        %1045 = vmatprep.subr.mxu0 0.0
        %1046 = vmatpush1.msra.mxu0 0.0
        %1047 = vmatprep.subr.mxu0 0.0
        %1048 = vmatpush1.msra.mxu0 0.0
        %1049 = vmatprep.subr.mxu0 0.0
        %1050 = vmatpush1.msra.mxu0 0.0
        %1051 = vmatprep.subr.mxu0 0.0
        %1052 = vmatpush1.msra.mxu0 0.0
        %1053 = vmatprep.subr.mxu0 0.0
        %1054 = vmatpush1.msra.mxu0 0.0
        %1055 = vmatprep.subr.mxu0 0.0
        %1056 = vmatpush1.msra.mxu0 0.0
        %1057 = vmatprep.mubr.f32.mxu0 0.0
        %1058 = vmatmul.mubr.f32.gmra.mrb[0].mxu0 %v991
        %v1059 = vpop.f32.mrb[0].mxu0
        %v1060 = vadd.f32 0.0, %v1059
        %v1061 = vpop.f32.mrb[0].mxu0
        %1062 = vdwg.mxu0
        %v1063 = vadd.f32 %v899, %v1060
        %v1064 = vmul.f32 %v1063, 0.25
        %1065 = vst [vmem:[%s173] sm:$0xff] %v1064
        %s1066 = sand.u32 %s75, 1
        %s1067 = scalar_lea.sflag [#allocation4], %s1066
        %s1068 = sand.u32 %s75, 1
        %s1069 = smul.addr %s1068, 8
        %s1070 = scalar_lea.vmem [#allocation7], %s1069
        // Predicated region
        $region37: #{tpu_custom_call.1} parent=27 // pred_check
          %p1071 = pneg %p85
        $region38: #{tpu_custom_call.1} parent=27 // pred_check_branch
          %1073 = sbr.rel (%p1071) target = $region40
        $region39: #{tpu_custom_call.1} parent=27 // pred_region
          %s1075 = ssub.s32 128, 128
          %1076 = vsyncadd %s1067, %s1075
          %s1077 = smul.addr %s20, 128
          %s1078 = scalar_lea.hbm %s2, %s1077
          %s1080 = sshll.u32 %s1070, 4
          %s1081 = int_to_ptr.vmem [resolvable:$true] %s1080
          %1083 = dma.vmem_to_hbm [thread:$0]  %s1081, 128, %s1078, %s1067
        $region40: #{tpu_custom_call.1} parent=27 // pred_fallthru
          _
      $region28: #{tpu_custom_call.1} parent=5 // pred_fallthru
        _
      %p1084 = scmp.le.s32.totalorder 2, %s15
      // Predicated region
      $region41: #{tpu_custom_call.1} parent=5 // pred_check
        %p1085 = pneg %p1084
      $region42: #{tpu_custom_call.1} parent=5 // pred_check_branch
        %1087 = sbr.rel (%p1085) target = $region44
      $region43: #{tpu_custom_call.1} parent=5 // pred_region
        %s1088 = ssub.s32 %s15, 2
        // Predicated region
        $region45: #{tpu_custom_call.1} parent=43 // pred_check
          %p1089 = pneg %p91
        $region46: #{tpu_custom_call.1} parent=43 // pred_check_branch
          %1091 = sbr.rel (%p1089) target = $region48
        $region47: #{tpu_custom_call.1} parent=43 // pred_region
          %s1092 = sand.u32 %s76, 1
          %s1093 = scalar_lea.sflag [#allocation4], %s1092
          %s1094 = sand.u32 %s76, 1
          %s1095 = smul.addr %s1094, 8
          %s1096 = scalar_lea.vmem [#allocation7], %s1095
          %1097 = dma.done %s1093, 128
        $region48: #{tpu_custom_call.1} parent=43 // pred_fallthru
          _
      $region44: #{tpu_custom_call.1} parent=5 // pred_fallthru
        _
    $region6: #{tpu_custom_call.1} parent=1 // loop_footer
      %s19 = sadd.s32 1, %s15
    $region7: #{tpu_custom_call.1} parent=1 // loop_footer_branch
      %14 = sbr.rel target = $region3
    $region8: #{tpu_custom_call.1} parent=1 // loop_exit
      _
    %1098 = vsyncpa [#allocation3], 1
    %s1099 = scalar_lea.sflag [#allocation3], 1
    %1100 = vsyncpa %s1099, 1
    %1101 = vsyncpa [#allocation6], 1
    %1102 = vsyncpa [#allocation4], 1
    %s1103 = scalar_lea.sflag [#allocation4], 1
    %1104 = vsyncpa %s1103, 1

</llo_original>
